<compile_context>
chip_gen: v7x
topology: tpu7x:2x2x1
jax: 0.10.0
libtpu: 0.0.40
codegen_flags: <defaults>
</compile_context>

<pallas_src>
import functools

import numpy as np
import jax
import jax.numpy as jnp
from jax.experimental import pallas as pl
from jax.experimental.pallas import tpu as pltpu


def _cdiv(a, b):
    return -(-a // b)


def _round_down(v, m):
    return (v // m) * m


def _round_up(v, m):
    return _cdiv(v, m) * m


def _chunk_width(out_block):
    # MXU N-dim per chunk: 256 fills the v6e/v7x 256-wide MXU; on v5e a 256-wide dot is
    # simply two internal 128-wide passes, so it is never worse.
    return 256 if out_block >= 256 else min(128, out_block)


def _block_vmem_bytes(rt, nt, lb, K):
    """Per-grid-step VMEM footprint: double-buffered in/out blocks + the bf16 selection
    matrix + the per-chunk matmul temporaries (f32 slice, hi/lo bf16 halves, f32 acc)."""
    sc = _chunk_width(nt)
    srows = min(sc * K, lb)
    io = 4 * 2 * rt * (lb + nt)                 # f32 input + output blocks, double-buffered
    sel = 2 * 2 * srows * sc                    # bf16 selection matrix (double-buffered)
    scratch = rt * srows * (4 + 2 + 2) + 4 * rt * sc
    return io + sel + scratch


def _pick_tiles(rows, L, K, nl, budget):
    """(row_tile, out_seq_tile, in_seq_tile) under a per-step VMEM budget.

    Legality: row tile is a multiple of 8 or == rows; seq tiles are a multiple of 128 or
    equal to the full dim (in_seq_tile = out_seq_tile * K stays a multiple of 128).
    """
    rt = rows if rows <= 256 else 256

    def fits(rt_, nt_, lb_):
        return _block_vmem_bytes(rt_, nt_, lb_, K) <= budget

    if fits(rt, nl, L):
        return rt, nl, L                         # single seq block (full dims are legal)

    nt = min(_round_up(nl, 128),
             max(128, _round_down(budget // max(1, 8 * rt * (K + 1)), 128)))
    lb = nt * K
    while not fits(rt, nt, lb) and nt > 128:
        nt = max(128, _round_down(nt // 2, 128))
        lb = nt * K
    while not fits(rt, nt, lb) and rt > 8:
        rt = max(8, _round_up(rt // 2, 8))
    # TODO(synk): pathological tiny-row / huge-K cases can still exceed the budget; the
    # proper fix is the strided/gather-DMA path mentioned at the top of the file.
    return rt, nt, lb


def _vmem_capacity_bytes():
    try:
        return int(pltpu.get_tpu_info().vmem_capacity_bytes)
    except Exception:
        return 64 * 1024 * 1024                  # conservative (v7x per-TensorCore VMEM)


def _downsample_kernel(x_ref, sel_ref, o_ref, *, K, sc, n_seq_blocks,
                       out_full, in_full, out_last, in_last):
    """x_ref: (rt, lb) tile of (rows, L); sel_ref: (srows, sc) bf16 0/1 selection matrix
    (resident, constant block index); o_ref: (rt, nt) tile of (rows, nl).

    out[r, j] = x[r, j * K], computed per <=256-output-lane chunk via a 0/1 selection
    matmul on the MXU (the MXU performs the lane compaction the VPU cannot)."""

    def emit(out_valid, in_valid):
        # All extents below are static Python ints -> fully unrolled, no masking.
        for m in range(_cdiv(out_valid, sc)):
            o_lo = m * sc
            w_out = min(sc, out_valid - o_lo)
            i_lo = o_lo * K
            in_w = min(sc * K, in_valid - i_lo)
            # Every valid output column's source lane lies inside the (truncated) chunk,
            # so padded / stale input columns never enter the matmul.
            assert in_w >= (w_out - 1) * K + 1

            xm = x_ref[:, i_lo:i_lo + in_w].astype(jnp.float32)
            # 2-term bf16 split: the weights are exactly 0/1 in bf16, so each output is
            # hi(x) + lo(x) reassembled by the f32 MXU accumulator -> 2 plain bf16 passes
            # instead of the 6-pass f32 emulation.  Residual error <= ~4e-6 relative.
            x_hi = xm.astype(jnp.bfloat16)
            x_lo = (xm - x_hi.astype(jnp.float32)).astype(jnp.bfloat16)
            sel = sel_ref[:in_w, :w_out]
            o_ref[:, o_lo:o_lo + w_out] = (
                jnp.dot(x_hi, sel, preferred_element_type=jnp.float32)
                + jnp.dot(x_lo, sel, preferred_element_type=jnp.float32))

    if n_seq_blocks == 1 or (out_last == out_full and in_last == in_full):
        emit(out_last, in_last)
    else:
        last = n_seq_blocks - 1

        @pl.when(pl.program_id(1) != last)
        def _():
            emit(out_full, in_full)

        @pl.when(pl.program_id(1) == last)
        def _():
            emit(out_last, in_last)


@functools.lru_cache(maxsize=None)
def _build_call(rows, L, nl, K, rt, nt, lb, sc, in_dtype, vmem_limit):
    n_r = _cdiv(rows, rt)
    n_s = _cdiv(nl, nt)
    out_last = nl - (n_s - 1) * nt
    in_last = L - (n_s - 1) * lb
    srows = min(sc * K, lb)

    kernel = functools.partial(
        _downsample_kernel, K=K, sc=sc, n_seq_blocks=n_s,
        out_full=nt, in_full=lb, out_last=out_last, in_last=in_last)

    call = pl.pallas_call(
        kernel,
        out_shape=jax.ShapeDtypeStruct((rows, nl), jnp.float32),
        grid=(n_r, n_s),
        in_specs=[
            # Input seq block j covers the nt*K contiguous samples feeding output block j.
            pl.BlockSpec((rt, lb), lambda ri, si: (ri, si)),
            # Constant block index: the 0/1 selection matrix is DMA'd once and stays
            # resident in VMEM for the whole grid.
            pl.BlockSpec((srows, sc), lambda ri, si: (0, 0)),
        ],
        out_specs=pl.BlockSpec((rt, nt), lambda ri, si: (ri, si)),
        compiler_params=pltpu.CompilerParams(
            dimension_semantics=("parallel", "parallel"),
            vmem_limit_bytes=int(vmem_limit)),
    )
    return jax.jit(call)


class Downsample:
    """JAX/Pallas port of the PyTorch Downsample transform (no learnable params)."""

    def __init__(self, input_shape: tuple, sample_rate: int, *,
                 vmem_block_budget: int = None,
                 xla_fallback_elements: int = 16384,
                 min_pallas_out_len: int = 128,
                 max_pallas_sample_rate: int = 32,
                 force_pallas: bool = False):
        assert len(input_shape) == 2, "Expecting shape in format (n_channels, seq_len)!"
        self.sample_rate = int(sample_rate)
        self.num_dim, self.length_x = int(input_shape[0]), int(input_shape[1])
        last_one = 1 if (self.length_x % self.sample_rate) > 0 else 0
        self.new_length = int(np.floor(self.length_x / self.sample_rate)) + last_one
        self.output_shape = (self.num_dim, self.new_length)

        self.vmem_capacity = _vmem_capacity_bytes()
        if vmem_block_budget is None:
            # Bigger per-step tiles on 128-MiB-VMEM parts (v5e/v6e); conservative on v7x.
            vmem_block_budget = (40 * 1024 * 1024
                                 if self.vmem_capacity >= 96 * 1024 * 1024
                                 else 16 * 1024 * 1024)
        self.vmem_block_budget = int(vmem_block_budget)
        self.xla_fallback_elements = int(xla_fallback_elements)
        self.min_pallas_out_len = int(min_pallas_out_len)
        self.max_pallas_sample_rate = int(max_pallas_sample_rate)
        self.force_pallas = bool(force_pallas)

    def _use_xla_fallback(self, x):
        if self.force_pallas:
            return False
        if self.xla_fallback_elements and x.size < self.xla_fallback_elements:
            return True   # custom-call / per-step overhead dwarfs the copy
        if self.new_length < self.min_pallas_out_len:
            return True   # sub-128 output lanes -> masked partial stores, tiny MXU N dim
        if self.sample_rate > self.max_pallas_sample_rate:
            return True   # K-times HBM over-read; see gather-DMA TODO at top of file
        return False

    def __call__(self, x):
        # x: (batch, channels, seq_len) -- same NCL convention as the PyTorch module.
        x = jnp.asarray(x)
        assert x.ndim == 3
        B, C, L = x.shape
        assert (C, L) == (self.num_dim, self.length_x)
        K, nl = self.sample_rate, self.new_length

        if K == 1:
            return x.astype(jnp.float32)
        if self._use_xla_fallback(x):
            return x[:, :, ::K].astype(jnp.float32)

        rows = B * C
        x2d = x.reshape(rows, L)                     # layout-preserving for NCL; free

        rt, nt, lb = _pick_tiles(rows, L, K, nl, self.vmem_block_budget)
        n_r, n_s = _cdiv(rows, rt), _cdiv(nl, nt)

        # v7x shards the parallel grid axes across its 2 TensorCores; expose >= 2 steps
        # for medium single-block problems (harmless one extra step elsewhere).
        if n_r == 1 and n_s == 1:
            if nl >= 256:
                nt2 = _round_up(_cdiv(nl, 2), 128)
                if nt2 < nl:
                    nt, lb = nt2, nt2 * K
                    n_s = _cdiv(nl, nt)
            elif rows >= 16:
                rt2 = _round_up(_cdiv(rows, 2), 8)
                if rt2 < rows:
                    rt = rt2
                    n_r = _cdiv(rows, rt)

        # Precomputed constant selection matrix S[r, j] = 1 iff r == j*K.  0/1 is exact in
        # bf16, so the per-chunk dot runs as plain bf16 MXU passes.
        sc = _chunk_width(nt)
        srows = min(sc * K, lb)
        r = np.arange(srows)[:, None]
        c = np.arange(sc)[None, :]
        sel = jnp.asarray((r == c * K).astype(np.float32), dtype=jnp.bfloat16)

        vmem_limit = max(32 * 1024 * 1024,
                         _block_vmem_bytes(rt, nt, lb, K) + 4 * 1024 * 1024)
        vmem_limit = min(vmem_limit, self.vmem_capacity)

        call = _build_call(rows, L, nl, K, rt, nt, lb, sc, str(x.dtype), vmem_limit)
        out2d = call(x2d, sel)
        return out2d.reshape(B, C, nl)


if __name__ == "__main__":
    def _check(B, C, L, K, **mod_kwargs):
        key = jax.random.PRNGKey(0)
        x = jax.random.normal(key, (B, C, L), dtype=jnp.float32)
        mod = Downsample((C, L), K, **mod_kwargs)
        out = jax.block_until_ready(mod(x))
        ref = np.asarray(x)[:, :, ::K].astype(np.float32)
        assert out.shape == (B, C, mod.new_length), (out.shape, (B, C, mod.new_length))
        assert out.dtype == jnp.float32
        np.testing.assert_allclose(np.asarray(out), ref, rtol=1e-4, atol=1e-6)

    # 1) Canonical small case forced through the Pallas path (single tiny block, odd sizes).
    _check(2, 4, 16, 3, force_pallas=True)
    # 2) Single row block, seq axis split into 2 steps (v7x 2-TensorCore nudge) + ragged tail.
    _check(1, 20, 1000, 3, force_pallas=True)
    # 3) Multi-block tiling (small VMEM budget) with a partial last seq block.
    _check(1, 20, 9000, 4, force_pallas=True, vmem_block_budget=2 * 1024 * 1024)
    # 4) Collapsed (B*C) rows wider than the 256-row tile (edge row block) + 256-wide chunks.
    _check(4, 70, 2048, 4, force_pallas=True)
    # 5) Default gating: tiny tensors / short outputs take the plain-XLA fast path.
    _check(2, 4, 16, 3)

    print("KERNEL_OK")
</pallas_src>

<mosaic_0001>
module attributes {stable_mosaic.version = 11 : i64} {
  func.func @_downsample_kernel(%arg0: i32, %arg1: i32, %arg2: memref<8x16xf32, #tpu.memory_space<vmem>>, %arg3: memref<16x6xbf16, #tpu.memory_space<vmem>>, %arg4: memref<8x6xf32, #tpu.memory_space<vmem>>) attributes {dimension_semantics = [#tpu.dimension_semantics<parallel>, #tpu.dimension_semantics<parallel>], iteration_bounds = array<i64: 1, 1>, scalar_prefetch = 0 : i64, scratch_operands = 0 : i64, tpu.core_type = #tpu.core_type<tc>, window_params = [{transform_indices = @transform_0, window_bounds = array<i64: 8, 16>}, {pipeline_mode = #tpu.pipeline_mode<synchronous>, transform_indices = @transform_1, window_bounds = array<i64: 16, 6>}, {transform_indices = @transform_2, window_bounds = array<i64: 8, 6>}]} {
    %c0 = arith.constant 0 : index
    %c0_0 = arith.constant 0 : index
    %0 = vector.load %arg2[%c0, %c0_0] : memref<8x16xf32, #tpu.memory_space<vmem>>, vector<8x16xf32>
    %1 = arith.truncf %0 : vector<8x16xf32> to vector<8x16xbf16>
    %2 = arith.extf %1 : vector<8x16xbf16> to vector<8x16xf32>
    %3 = arith.subf %0, %2 : vector<8x16xf32>
    %4 = arith.truncf %3 : vector<8x16xf32> to vector<8x16xbf16>
    %c0_1 = arith.constant 0 : index
    %c0_2 = arith.constant 0 : index
    %5 = vector.load %arg3[%c0_1, %c0_2] : memref<16x6xbf16, #tpu.memory_space<vmem>>, vector<16x6xbf16>
    %cst = arith.constant dense<0.000000e+00> : vector<8x6xf32>
    %6 = tpu.matmul %1, %5, %cst {dimension_numbers = #tpu.dot_dimension_numbers<[1], [0], [0], [1], [0, 0, 1, 1], [], []>} : vector<8x16xbf16>, vector<16x6xbf16>, vector<8x6xf32> -> vector<8x6xf32>
    %cst_3 = arith.constant dense<0.000000e+00> : vector<8x6xf32>
    %7 = tpu.matmul %4, %5, %cst_3 {dimension_numbers = #tpu.dot_dimension_numbers<[1], [0], [0], [1], [0, 0, 1, 1], [], []>} : vector<8x16xbf16>, vector<16x6xbf16>, vector<8x6xf32> -> vector<8x6xf32>
    %8 = arith.addf %6, %7 : vector<8x6xf32>
    %c0_4 = arith.constant 0 : index
    %c0_5 = arith.constant 0 : index
    %9 = vector.load %arg4[%c0_4, %c0_5] : memref<8x6xf32, #tpu.memory_space<vmem>>, vector<8x6xf32>
    tpu.vector_store %arg4[%c0_4, %c0_5], %8 {strides = array<i32>} : memref<8x6xf32, #tpu.memory_space<vmem>>, vector<8x6xf32>,
    return
  }
  func.func @transform_0(%arg0: i32, %arg1: i32) -> (i32, i32) {
    %c0_i32 = arith.constant 0 : i32
    return %arg0, %arg1 : i32, i32
  }
  func.func @transform_1(%arg0: i32, %arg1: i32) -> (i32, i32) {
    %c0_i32 = arith.constant 0 : i32
    %c0_i32_0 = arith.constant 0 : i32
    %c0_i32_1 = arith.constant 0 : i32
    return %c0_i32, %c0_i32_0 : i32, i32
  }
  func.func @transform_2(%arg0: i32, %arg1: i32) -> (i32, i32) {
    %c0_i32 = arith.constant 0 : i32
    return %arg0, %arg1 : i32, i32
  }
}

</mosaic_0001>

<llo_original>
// kernel: tpu_custom_call.1
$region0: #{tpu_custom_call.1}
  #allocation0 [shape = 'u32[]', space=smem, size = 0x4, offset = 0x4, fixed_abs, tag = 'smem constant byte address 0x4 - core index']
  #allocation1 [shape = 'u32[144,128]{1,0:T(1,128)}', space=vmem, size = 0x12000, scoped, tag = 'internal scratch']
  %s0 = inlined_call_operand.vmem [shape: f32[8,16], index: 0, kind: input, shape index: {}]
  %s1 = inlined_call_operand.vmem [shape: bf16[16,6], index: 1, kind: input, shape index: {}]
  %s2 = inlined_call_operand.hbm [shape: f32[8,6], index: 2, kind: output, shape index: {}]
  %s3 = sld [smem:[#allocation0]]
  $region18: #{tpu_custom_call.1} parent=0
    _
  %s5 = ssub.s32 1, %s3
  %s6 = scalar_select 0, %s5, %s3
  $region1: #{tpu_custom_call.1} parent=0
    #allocation2 [shape = 'u8[4096]{0}', space=vmem, size = 0x1000, scoped, tag = 'output window, operand 0, single buffered']
    #allocation3 [shape = 's32[1]{0}', space=sflag, size = 0x4, scoped, tag = 'scoped memory for tpu_custom_call.1']
    %7 = vsyncpa [#allocation3], 0
    // Predicated region
    $region2: #{tpu_custom_call.1} parent=1 // pred_check
      _
    $region3: #{tpu_custom_call.1} parent=1 // pred_check_branch
      %9 = sbr.rel (0) target = $region5
    $region4: #{tpu_custom_call.1} parent=1 // pred_region
      _
    $region5: #{tpu_custom_call.1} parent=1 // pred_fallthru
      _
    // Predicated region
    $region6: #{tpu_custom_call.1} parent=1 // pred_check
      _
    $region7: #{tpu_custom_call.1} parent=1 // pred_check_branch
      %11 = sbr.rel (0) target = $region9
    $region8: #{tpu_custom_call.1} parent=1 // pred_region
      _
    $region9: #{tpu_custom_call.1} parent=1 // pred_fallthru
      _
    %v13 = vld [vmem:[%s0] sm:$0xff]
    %v14 = vpack.c.bf16 %v13, %v13
    %v15 = vunpack.c.l.bf16 %v14
    %v16 = vsub.f32 %v13, %v15
    %v17 = vpack.c.bf16 %v16, %v16
    %v18 = vld [vmem:[%s1] sm:$0xf]
    %v19 = vld [vmem:[%s1 + $0x4] sm:$0xf]
    %v22 = vunpack.c.l.b16 %v18
    %v23 = vunpack.c.l.b16 %v19
    %v24 = vpack.c.b16 %v23, %v22
    %vm26 = vcmask 130048
    %v28 = vsel %vm26, %v17, 0
    %30 = vmatprep.subr.bf16.mxu0 0
    %31 = vmatpush1.bf16.msra.mxu0 %v24
    %32 = vmatprep.subr.bf16.mxu0 0
    %33 = vmatpush1.bf16.msra.mxu0 0
    %34 = vmatprep.subr.bf16.mxu0 0
    %35 = vmatpush1.bf16.msra.mxu0 0
    %36 = vmatprep.subr.bf16.mxu0 0
    %37 = vmatpush1.bf16.msra.mxu0 0
    %38 = vmatprep.subr.bf16.mxu0 0
    %39 = vmatpush1.bf16.msra.mxu0 0
    %40 = vmatprep.subr.bf16.mxu0 0
    %41 = vmatpush1.bf16.msra.mxu0 0
    %42 = vmatprep.subr.bf16.mxu0 0
    %43 = vmatpush1.bf16.msra.mxu0 0
    %44 = vmatprep.subr.bf16.mxu0 0
    %45 = vmatpush1.bf16.msra.mxu0 0
    %46 = vmatprep.subr.bf16.mxu0 0
    %47 = vmatpush1.bf16.msra.mxu0 0
    %48 = vmatprep.subr.bf16.mxu0 0
    %49 = vmatpush1.bf16.msra.mxu0 0
    %50 = vmatprep.subr.bf16.mxu0 0
    %51 = vmatpush1.bf16.msra.mxu0 0
    %52 = vmatprep.subr.bf16.mxu0 0
    %53 = vmatpush1.bf16.msra.mxu0 0
    %54 = vmatprep.subr.bf16.mxu0 0
    %55 = vmatpush1.bf16.msra.mxu0 0
    %56 = vmatprep.subr.bf16.mxu0 0
    %57 = vmatpush1.bf16.msra.mxu0 0
    %58 = vmatprep.subr.bf16.mxu0 0
    %59 = vmatpush1.bf16.msra.mxu0 0
    %60 = vmatprep.subr.bf16.mxu0 0
    %61 = vmatpush1.bf16.msra.mxu0 0
    %62 = vmatprep.mubr.bf16.mxu0 0
    %63 = vmatmul.mubr.bf16.gmra.mrb[0].mxu0 %v28
    %v64 = vpop.f32.mrb[0].mxu0
    %v65 = vadd.f32 0.0, %v64
    %v66 = vpop.f32.mrb[0].mxu0
    %v67 = vpop.f32.mrb[0].mxu0
    %v68 = vpop.f32.mrb[0].mxu0
    %69 = vdwg.mxu0
    %v71 = vsel %vm26, %v14, 0
    %73 = vmatprep.subr.bf16.mxu0 0
    %74 = vmatpush1.bf16.msra.mxu0 %v24
    %75 = vmatprep.subr.bf16.mxu0 0
    %76 = vmatpush1.bf16.msra.mxu0 0
    %77 = vmatprep.subr.bf16.mxu0 0
    %78 = vmatpush1.bf16.msra.mxu0 0
    %79 = vmatprep.subr.bf16.mxu0 0
    %80 = vmatpush1.bf16.msra.mxu0 0
    %81 = vmatprep.subr.bf16.mxu0 0
    %82 = vmatpush1.bf16.msra.mxu0 0
    %83 = vmatprep.subr.bf16.mxu0 0
    %84 = vmatpush1.bf16.msra.mxu0 0
    %85 = vmatprep.subr.bf16.mxu0 0
    %86 = vmatpush1.bf16.msra.mxu0 0
    %87 = vmatprep.subr.bf16.mxu0 0
    %88 = vmatpush1.bf16.msra.mxu0 0
    %89 = vmatprep.subr.bf16.mxu0 0
    %90 = vmatpush1.bf16.msra.mxu0 0
    %91 = vmatprep.subr.bf16.mxu0 0
    %92 = vmatpush1.bf16.msra.mxu0 0
    %93 = vmatprep.subr.bf16.mxu0 0
    %94 = vmatpush1.bf16.msra.mxu0 0
    %95 = vmatprep.subr.bf16.mxu0 0
    %96 = vmatpush1.bf16.msra.mxu0 0
    %97 = vmatprep.subr.bf16.mxu0 0
    %98 = vmatpush1.bf16.msra.mxu0 0
    %99 = vmatprep.subr.bf16.mxu0 0
    %100 = vmatpush1.bf16.msra.mxu0 0
    %101 = vmatprep.subr.bf16.mxu0 0
    %102 = vmatpush1.bf16.msra.mxu0 0
    %103 = vmatprep.subr.bf16.mxu0 0
    %104 = vmatpush1.bf16.msra.mxu0 0
    %105 = vmatprep.mubr.bf16.mxu0 0
    %106 = vmatmul.mubr.bf16.gmra.mrb[0].mxu0 %v71
    %v107 = vpop.f32.mrb[0].mxu0
    %v108 = vadd.f32 %v65, %v107
    %v109 = vpop.f32.mrb[0].mxu0
    %v110 = vpop.f32.mrb[0].mxu0
    %v111 = vpop.f32.mrb[0].mxu0
    %112 = vdwg.mxu0
    %vm113 = vcmask 48128
    %114 = vst.msk [vmem:[#allocation2] sm:$0xff] %vm113, %v108
    // Predicated region
    $region10: #{tpu_custom_call.1} parent=1 // pred_check
      _
    $region11: #{tpu_custom_call.1} parent=1 // pred_check_branch
      %116 = sbr.rel (0) target = $region13
    $region12: #{tpu_custom_call.1} parent=1 // pred_region
      %s118 = ssub.s32 128, 128
      %119 = vsyncadd [#allocation3], %s118
      %s121 = sshll.u32 [#allocation2], 4
      %s122 = int_to_ptr.vmem [resolvable:$true] %s121
      %124 = dma.vmem_to_hbm [thread:$0]  %s122, 128, %s2, [#allocation3]
    $region13: #{tpu_custom_call.1} parent=1 // pred_fallthru
      _
    // Predicated region
    $region14: #{tpu_custom_call.1} parent=1 // pred_check
      _
    $region15: #{tpu_custom_call.1} parent=1 // pred_check_branch
      %126 = sbr.rel (0) target = $region17
    $region16: #{tpu_custom_call.1} parent=1 // pred_region
      %127 = dma.done [#allocation3], 128
    $region17: #{tpu_custom_call.1} parent=1 // pred_fallthru
      _
    %128 = vsyncpa [#allocation3], 1

</llo_original>
